<compile_context>
chip_gen: v7x
topology: tpu7x:2x2x1
jax: 0.10.0
libtpu: 0.0.40
codegen_flags: <defaults>
</compile_context>

<pallas_src>
import functools

import jax
import jax.numpy as jnp
from jax.experimental import pallas as pl
from jax.experimental.pallas import tpu as pltpu

_VMEM_LIMIT = 32 * 1024 * 1024  # explicit scoped-VMEM limit (fits v5e/v6e/v7x)


# ----------------------------------------------------------------------------
# Kernel 1: per-row-tile precompute of XW_l (bf16, MXU operand) and Z = XW_r + b
# ----------------------------------------------------------------------------
def _precompute_kernel(x_ref, wl_ref, wr_ref, b_ref, xwl_ref, z_ref):
    x = x_ref[...]                       # (tm, F_in) f32
    wl = wl_ref[0]                       # (F_in, F_out)
    wr = wr_ref[0]
    xwl = jnp.dot(x, wl, preferred_element_type=jnp.float32)
    z = jnp.dot(x, wr, preferred_element_type=jnp.float32) + b_ref[0]
    xwl_ref[0] = xwl.astype(xwl_ref.dtype)
    z_ref[0] = z


def precompute_xw(x, wl_stack, wr_stack, b_stack, *, tm):
    """x:(N,Fin) f32, wl/wr:(T,Fin,Fout), b:(T,1,Fout) -> (XWl bf16, Z f32) (T,N,Fout)."""
    n_pad, f_in = x.shape
    t_dim, _, f_out = wl_stack.shape
    grid = (t_dim, n_pad // tm)
    return pl.pallas_call(
        _precompute_kernel,
        out_shape=(
            jax.ShapeDtypeStruct((t_dim, n_pad, f_out), jnp.bfloat16),
            jax.ShapeDtypeStruct((t_dim, n_pad, f_out), jnp.float32),
        ),
        grid_spec=pltpu.PrefetchScalarGridSpec(
            num_scalar_prefetch=0,
            grid=grid,
            in_specs=[
                pl.BlockSpec((tm, f_in), lambda t, i: (i, 0)),
                pl.BlockSpec((1, f_in, f_out), lambda t, i: (t, 0, 0)),
                pl.BlockSpec((1, f_in, f_out), lambda t, i: (t, 0, 0)),
                pl.BlockSpec((1, 1, f_out), lambda t, i: (t, 0, 0)),
            ],
            out_specs=[
                pl.BlockSpec((1, tm, f_out), lambda t, i: (t, i, 0)),
                pl.BlockSpec((1, tm, f_out), lambda t, i: (t, i, 0)),
            ],
        ),
        compiler_params=pltpu.CompilerParams(
            dimension_semantics=("parallel", "parallel"),
            vmem_limit_bytes=_VMEM_LIMIT,
        ),
    )(x, wl_stack, wr_stack, b_stack)


# ----------------------------------------------------------------------------
# Kernel 2: tiled main-branch SAGE aggregation  out = A @ XWl + Z (+ ReLU)
# ----------------------------------------------------------------------------
def _sage_agg_kernel(a_ref, xwl_ref, z_ref, o_ref, acc_ref, *, apply_relu):
    k = pl.program_id(1)

    @pl.when(k == 0)
    def _():
        acc_ref[...] = jnp.zeros_like(acc_ref)

    acc_ref[...] += jnp.dot(a_ref[...], xwl_ref[...],
                            preferred_element_type=jnp.float32)

    @pl.when(k == pl.num_programs(1) - 1)
    def _():
        out = acc_ref[...] + z_ref[...]
        if apply_relu:
            out = jnp.maximum(out, 0.0)
        o_ref[...] = out.astype(o_ref.dtype)


def sage_conv_main(a_bf16, xwl, z, *, apply_relu, tm, tk):
    n_pad = a_bf16.shape[0]
    f_out = xwl.shape[1]
    grid = (n_pad // tm, n_pad // tk)
    kernel = functools.partial(_sage_agg_kernel, apply_relu=apply_relu)
    cost = pl.CostEstimate(
        flops=2 * n_pad * n_pad * f_out,
        transcendentals=0,
        bytes_accessed=n_pad * n_pad * 2 + n_pad * f_out * (2 + 4 + 4),
    )
    return pl.pallas_call(
        kernel,
        out_shape=jax.ShapeDtypeStruct((n_pad, f_out), jnp.float32),
        grid_spec=pltpu.PrefetchScalarGridSpec(
            num_scalar_prefetch=0,
            grid=grid,
            in_specs=[
                pl.BlockSpec((tm, tk), lambda i, k: (i, k)),
                pl.BlockSpec((tk, f_out), lambda i, k: (k, 0)),
                pl.BlockSpec((tm, f_out), lambda i, k: (i, 0)),
            ],
            out_specs=pl.BlockSpec((tm, f_out), lambda i, k: (i, 0)),
            scratch_shapes=[pltpu.VMEM((tm, f_out), jnp.float32)],
        ),
        compiler_params=pltpu.CompilerParams(
            dimension_semantics=("parallel", "arbitrary"),
            vmem_limit_bytes=_VMEM_LIMIT,
        ),
        cost_estimate=cost,
    )(a_bf16, xwl, z)


# ----------------------------------------------------------------------------
# Kernel 3: fused tree branch (T SAGE convs) + gating softmax + residual add
# ----------------------------------------------------------------------------
def _tree_gate_kernel(a_ref, hwl_ref, z_ref, gw_ref, gb_ref, xmain_ref, o_ref,
                      acc_ref, *, n_tree, res_weight):
    # a_ref:(T,tm,tk) bf16, hwl_ref:(T,tk,F) bf16, z_ref:(T,tm,F) f32,
    # gw_ref:(T,1,F) f32, gb_ref:(T,) f32 in SMEM, xmain_ref/o_ref:(tm,F) f32,
    # acc_ref:(T,tm,F) f32 VMEM scratch.
    k = pl.program_id(1)

    @pl.when(k == 0)
    def _():
        acc_ref[...] = jnp.zeros_like(acc_ref)

    for t in range(n_tree):
        acc_ref[t] += jnp.dot(a_ref[t], hwl_ref[t],
                              preferred_element_type=jnp.float32)

    @pl.when(k == pl.num_programs(1) - 1)
    def _():
        outs = [jnp.maximum(acc_ref[t] + z_ref[t], 0.0) for t in range(n_tree)]
        # gating scores: (tm, 1) each
        scores = [
            jnp.sum(outs[t] * gw_ref[t], axis=-1, keepdims=True) + gb_ref[t]
            for t in range(n_tree)
        ]
        # numerically stable softmax across the tree-layer axis
        m = scores[0]
        for t in range(1, n_tree):
            m = jnp.maximum(m, scores[t])
        exps = [jnp.exp(s - m) for s in scores]
        denom = exps[0]
        for t in range(1, n_tree):
            denom = denom + exps[t]
        inv = pl.reciprocal(denom, approx=True)      # EUP slot, free filler
        x_tree = outs[0] * (exps[0] * inv)
        for t in range(1, n_tree):
            x_tree = x_tree + outs[t] * (exps[t] * inv)
        o_ref[...] = (xmain_ref[...] + res_weight * x_tree).astype(o_ref.dtype)


def tree_gate(a_tree_bf16, hwl_stack, z_stack, gate_w, gate_b, x_main,
              res_weight, *, tm, tk):
    t_dim, n_pad, _ = a_tree_bf16.shape
    f_out = hwl_stack.shape[-1]
    grid = (n_pad // tm, n_pad // tk)
    kernel = functools.partial(_tree_gate_kernel, n_tree=t_dim,
                               res_weight=float(res_weight))
    cost = pl.CostEstimate(
        flops=2 * t_dim * n_pad * n_pad * f_out,
        transcendentals=t_dim * n_pad,
        bytes_accessed=t_dim * n_pad * n_pad * 2
        + t_dim * n_pad * f_out * (2 + 4) + n_pad * f_out * 8,
    )
    return pl.pallas_call(
        kernel,
        out_shape=jax.ShapeDtypeStruct((n_pad, f_out), jnp.float32),
        grid_spec=pltpu.PrefetchScalarGridSpec(
            num_scalar_prefetch=0,
            grid=grid,
            in_specs=[
                pl.BlockSpec((t_dim, tm, tk), lambda i, k: (0, i, k)),
                pl.BlockSpec((t_dim, tk, f_out), lambda i, k: (0, k, 0)),
                pl.BlockSpec((t_dim, tm, f_out), lambda i, k: (0, i, 0)),
                pl.BlockSpec((t_dim, 1, f_out), lambda i, k: (0, 0, 0)),
                pl.BlockSpec(memory_space=pltpu.MemorySpace.SMEM),
                pl.BlockSpec((tm, f_out), lambda i, k: (i, 0)),
            ],
            out_specs=pl.BlockSpec((tm, f_out), lambda i, k: (i, 0)),
            scratch_shapes=[pltpu.VMEM((t_dim, tm, f_out), jnp.float32)],
        ),
        compiler_params=pltpu.CompilerParams(
            dimension_semantics=("parallel", "arbitrary"),
            vmem_limit_bytes=_VMEM_LIMIT,
        ),
        cost_estimate=cost,
    )(a_tree_bf16, hwl_stack, z_stack, gate_w, gate_b, x_main)


# ----------------------------------------------------------------------------
# Glue (plain JAX): adjacency construction, padding, parameter init, forward
# ----------------------------------------------------------------------------
def build_mean_adj_stack(edge_list, n_pad):
    """Stack of row-normalized dense adjacencies for PyG SAGEConv mean aggr.

    edge_index[0] = source nodes, edge_index[1] = target nodes. Built directly
    into the (T, N, N) stack (no extra jnp.stack copy), cast to bf16 for MXU."""
    t = len(edge_list)
    a = jnp.zeros((t, n_pad, n_pad), jnp.float32)
    for i, ei in enumerate(edge_list):
        a = a.at[i, ei[1], ei[0]].add(1.0)
    deg = jnp.sum(a, axis=2, keepdims=True)
    return (a / jnp.maximum(deg, 1.0)).astype(jnp.bfloat16)


def _pad_to(x, shape):
    return jnp.pad(x, [(0, s - d) for d, s in zip(x.shape, shape)])


def _pick_tiles(n):
    # v7x has 64 MiB VMEM -> keep tiles modest; multiples of 128/256 for MXU fill.
    if n < 256:
        return 128, 128
    if n < 1024:
        return 256, 256
    return 256, 512


def init_sage_params(key, f_in, f_out):
    k1, k2, k3 = jax.random.split(key, 3)
    scale = 1.0 / jnp.sqrt(jnp.float32(f_in))
    w_l = jax.random.uniform(k1, (f_in, f_out), jnp.float32, -scale, scale)
    w_r = jax.random.uniform(k2, (f_in, f_out), jnp.float32, -scale, scale)
    b = jax.random.uniform(k3, (1, f_out), jnp.float32, -scale, scale)
    return w_l, w_r, b


def init_gate_params(key, f_out):
    k1, k2 = jax.random.split(key)
    scale = 1.0 / jnp.sqrt(jnp.float32(f_out))
    g_w = jax.random.uniform(k1, (1, f_out), jnp.float32, -scale, scale)
    g_b = jax.random.uniform(k2, (1, 1), jnp.float32, -scale, scale)
    return g_w, g_b


def layer_agg_forward(x, edge_index, params, *, num_layers, layers_tree, weight):
    main_ei, tree_eis = edge_index
    n, f_in = x.shape
    f_out = params["convs"][0][0].shape[1]

    tm, tk = _pick_tiles(n)
    big = max(tm, tk)
    n_pad = pl.cdiv(n, big) * big
    f_in_pad = pl.cdiv(f_in, 128) * 128
    f_out_pad = pl.cdiv(f_out, 128) * 128

    x_p = _pad_to(x, (n_pad, f_in_pad))
    a_main = build_mean_adj_stack([main_ei], n_pad)[0]        # (n_pad, n_pad) bf16

    # ---- main branch: num_layers chained SAGE convs (ReLU except last) ----
    h_cur = x_p
    cur_fin = f_in_pad
    for i in range(num_layers):
        w_l, w_r, b = params["convs"][i]
        wl_s = _pad_to(w_l, (cur_fin, f_out_pad))[None]
        wr_s = _pad_to(w_r, (cur_fin, f_out_pad))[None]
        b_s = _pad_to(b, (1, f_out_pad))[None]
        xwl, z = precompute_xw(h_cur, wl_s, wr_s, b_s, tm=tm)
        h_cur = sage_conv_main(a_main, xwl[0], z[0],
                               apply_relu=(i != num_layers - 1), tm=tm, tk=tk)
        cur_fin = f_out_pad
        # dropout: identity in eval mode
    x_main = h_cur

    if layers_tree < 1:
        return x_main[:n, :f_out]

    # ---- tree branch + gating + residual, fully fused ----
    a_tree = build_mean_adj_stack([tree_eis[t] for t in range(layers_tree)], n_pad)
    wl_s = jnp.stack([_pad_to(params["conv_tree"][t][0], (f_in_pad, f_out_pad))
                      for t in range(layers_tree)])
    wr_s = jnp.stack([_pad_to(params["conv_tree"][t][1], (f_in_pad, f_out_pad))
                      for t in range(layers_tree)])
    b_s = jnp.stack([_pad_to(params["conv_tree"][t][2], (1, f_out_pad))
                     for t in range(layers_tree)])
    hwl, z_tree = precompute_xw(x_p, wl_s, wr_s, b_s, tm=tm)

    gate_w = jnp.stack([_pad_to(params["gate"][t][0], (1, f_out_pad))
                        for t in range(layers_tree)])          # (T, 1, F_pad)
    gate_b = jnp.stack([params["gate"][t][1].reshape(())
                        for t in range(layers_tree)])          # (T,)

    out = tree_gate(a_tree, hwl, z_tree, gate_w, gate_b, x_main, weight,
                    tm=tm, tk=tk)
    return out[:n, :f_out]


# ----------------------------------------------------------------------------
# Pure-JAX f32 reference (for sanity check; bf16 MXU operands cause small drift)
# ----------------------------------------------------------------------------
def _reference(x, edge_index, params, *, num_layers, layers_tree, weight):
    main_ei, tree_eis = edge_index
    n = x.shape[0]

    def adj(ei):
        a = jnp.zeros((n, n), jnp.float32).at[ei[1], ei[0]].add(1.0)
        deg = jnp.sum(a, axis=1, keepdims=True)
        return a / jnp.maximum(deg, 1.0)

    def sage(a, h, p):
        w_l, w_r, b = p
        return (a @ h) @ w_l + h @ w_r + b

    a_main = adj(main_ei)
    h = x
    out = x
    for i in range(num_layers):
        out = sage(a_main, out, params["convs"][i])
        if i != num_layers - 1:
            out = jnp.maximum(out, 0.0)
    tree_outs, scores = [], []
    for i in range(layers_tree):
        t = jnp.maximum(sage(adj(tree_eis[i]), h, params["conv_tree"][i]), 0.0)
        g_w, g_b = params["gate"][i]
        tree_outs.append(t)
        scores.append(t @ g_w.T + g_b)
    alpha = jax.nn.softmax(jnp.concatenate(scores, axis=-1), axis=-1)
    x_tree = sum(tree_outs[i] * alpha[:, i:i + 1] for i in range(layers_tree))
    return out + weight * x_tree


# ----------------------------------------------------------------------------
if __name__ == "__main__":
    key = jax.random.PRNGKey(0)

    # Small, module-consistent shapes.
    N = 16
    IN_FEAT = 32
    OUT_FEAT = 32
    NUM_LAYERS = 2
    LAYERS_TREE = 2
    E = 48
    WEIGHT = 1.0

    keys = jax.random.split(key, 16)
    x = jax.random.normal(keys[0], (N, IN_FEAT), jnp.float32)

    main_ei = jnp.stack([
        jax.random.randint(keys[1], (E,), 0, N),
        jax.random.randint(keys[2], (E,), 0, N),
    ])
    tree_eis = [
        jnp.stack([
            jax.random.randint(keys[3 + 2 * i], (E,), 0, N),
            jax.random.randint(keys[4 + 2 * i], (E,), 0, N),
        ])
        for i in range(LAYERS_TREE)
    ]
    edge_index = (main_ei, tree_eis)

    # Deterministic synthetic parameters (not a checkpoint).
    params = {"convs": [], "conv_tree": [], "gate": []}
    for i in range(NUM_LAYERS):
        f_in = IN_FEAT if i == 0 else OUT_FEAT
        params["convs"].append(init_sage_params(keys[8 + i], f_in, OUT_FEAT))
    for i in range(LAYERS_TREE):
        params["conv_tree"].append(init_sage_params(keys[10 + i], IN_FEAT, OUT_FEAT))
        params["gate"].append(init_gate_params(keys[12 + i], OUT_FEAT))

    out = layer_agg_forward(
        x, edge_index, params,
        num_layers=NUM_LAYERS, layers_tree=LAYERS_TREE, weight=WEIGHT,
    )
    out = jax.block_until_ready(out)
    assert out.shape == (N, OUT_FEAT) and out.dtype == jnp.float32

    ref = _reference(x, edge_index, params,
                     num_layers=NUM_LAYERS, layers_tree=LAYERS_TREE, weight=WEIGHT)
    assert bool(jnp.all(jnp.isfinite(out)))
    assert bool(jnp.allclose(out, ref, rtol=5e-2, atol=5e-2))
    print("KERNEL_OK")
</pallas_src>

<mosaic_0001>
module attributes {stable_mosaic.version = 11 : i64} {
  func.func @_precompute_kernel(%arg0: i32, %arg1: i32, %arg2: memref<128x128xf32, #tpu.memory_space<vmem>>, %arg3: memref<1x128x128xf32, #tpu.memory_space<vmem>>, %arg4: memref<1x128x128xf32, #tpu.memory_space<vmem>>, %arg5: memref<1x1x128xf32, #tpu.memory_space<vmem>>, %arg6: memref<1x128x128xbf16, #tpu.memory_space<vmem>>, %arg7: memref<1x128x128xf32, #tpu.memory_space<vmem>>) attributes {dimension_semantics = [#tpu.dimension_semantics<parallel>, #tpu.dimension_semantics<parallel>], iteration_bounds = array<i64: 1, 1>, scalar_prefetch = 0 : i64, scratch_operands = 0 : i64, tpu.core_type = #tpu.core_type<tc>, window_params = [{transform_indices = @transform_0, window_bounds = array<i64: 128, 128>}, {transform_indices = @transform_1, window_bounds = array<i64: 1, 128, 128>}, {transform_indices = @transform_2, window_bounds = array<i64: 1, 128, 128>}, {transform_indices = @transform_3, window_bounds = array<i64: 1, 1, 128>}, {transform_indices = @transform_4, window_bounds = array<i64: 1, 128, 128>}, {transform_indices = @transform_5, window_bounds = array<i64: 1, 128, 128>}]} {
    %c0 = arith.constant 0 : index
    %c0_0 = arith.constant 0 : index
    %0 = vector.load %arg2[%c0, %c0_0] : memref<128x128xf32, #tpu.memory_space<vmem>>, vector<128x128xf32>
    %c0_1 = arith.constant 0 : index
    %c0_2 = arith.constant 0 : index
    %c0_3 = arith.constant 0 : index
    %1 = vector.load %arg3[%c0_1, %c0_2, %c0_3] : memref<1x128x128xf32, #tpu.memory_space<vmem>>, vector<1x128x128xf32>
    %2 = vector.shape_cast %1 : vector<1x128x128xf32> to vector<128x128xf32>
    %c0_4 = arith.constant 0 : index
    %c0_5 = arith.constant 0 : index
    %c0_6 = arith.constant 0 : index
    %3 = vector.load %arg4[%c0_4, %c0_5, %c0_6] : memref<1x128x128xf32, #tpu.memory_space<vmem>>, vector<1x128x128xf32>
    %4 = vector.shape_cast %3 : vector<1x128x128xf32> to vector<128x128xf32>
    %cst = arith.constant dense<0.000000e+00> : vector<128x128xf32>
    %5 = tpu.matmul %0, %2, %cst {dimension_numbers = #tpu.dot_dimension_numbers<[1], [0], [0], [1], [0, 0, 1, 1], [], []>} : vector<128x128xf32>, vector<128x128xf32>, vector<128x128xf32> -> vector<128x128xf32>
    %cst_7 = arith.constant dense<0.000000e+00> : vector<128x128xf32>
    %6 = tpu.matmul %0, %4, %cst_7 {dimension_numbers = #tpu.dot_dimension_numbers<[1], [0], [0], [1], [0, 0, 1, 1], [], []>} : vector<128x128xf32>, vector<128x128xf32>, vector<128x128xf32> -> vector<128x128xf32>
    %c0_8 = arith.constant 0 : index
    %c0_9 = arith.constant 0 : index
    %c0_10 = arith.constant 0 : index
    %7 = vector.load %arg5[%c0_8, %c0_9, %c0_10] : memref<1x1x128xf32, #tpu.memory_space<vmem>>, vector<1x1x128xf32>
    %8 = vector.shape_cast %7 : vector<1x1x128xf32> to vector<1x128xf32>
    %9 = vector.broadcast %8 : vector<1x128xf32> to vector<128x128xf32>
    %10 = arith.addf %6, %9 : vector<128x128xf32>
    %11 = arith.truncf %5 : vector<128x128xf32> to vector<128x128xbf16>
    %c0_11 = arith.constant 0 : index
    %c0_12 = arith.constant 0 : index
    %c0_13 = arith.constant 0 : index
    %12 = vector.load %arg6[%c0_11, %c0_12, %c0_13] : memref<1x128x128xbf16, #tpu.memory_space<vmem>>, vector<1x128x128xbf16>
    %13 = vector.shape_cast %12 : vector<1x128x128xbf16> to vector<128x128xbf16>
    %14 = vector.shape_cast %11 : vector<128x128xbf16> to vector<1x128x128xbf16>
    tpu.vector_store %arg6[%c0_11, %c0_12, %c0_13], %14 {strides = array<i32>} : memref<1x128x128xbf16, #tpu.memory_space<vmem>>, vector<1x128x128xbf16>,
    %c0_14 = arith.constant 0 : index
    %c0_15 = arith.constant 0 : index
    %c0_16 = arith.constant 0 : index
    %15 = vector.load %arg7[%c0_14, %c0_15, %c0_16] : memref<1x128x128xf32, #tpu.memory_space<vmem>>, vector<1x128x128xf32>
    %16 = vector.shape_cast %15 : vector<1x128x128xf32> to vector<128x128xf32>
    %17 = vector.shape_cast %10 : vector<128x128xf32> to vector<1x128x128xf32>
    tpu.vector_store %arg7[%c0_14, %c0_15, %c0_16], %17 {strides = array<i32>} : memref<1x128x128xf32, #tpu.memory_space<vmem>>, vector<1x128x128xf32>,
    return
  }
  func.func @transform_0(%arg0: i32, %arg1: i32) -> (i32, i32) {
    %c0_i32 = arith.constant 0 : i32
    %c0_i32_0 = arith.constant 0 : i32
    return %arg1, %c0_i32 : i32, i32
  }
  func.func @transform_1(%arg0: i32, %arg1: i32) -> (i32, i32, i32) {
    %c0_i32 = arith.constant 0 : i32
    %c0_i32_0 = arith.constant 0 : i32
    %c0_i32_1 = arith.constant 0 : i32
    return %arg0, %c0_i32, %c0_i32_0 : i32, i32, i32
  }
  func.func @transform_2(%arg0: i32, %arg1: i32) -> (i32, i32, i32) {
    %c0_i32 = arith.constant 0 : i32
    %c0_i32_0 = arith.constant 0 : i32
    %c0_i32_1 = arith.constant 0 : i32
    return %arg0, %c0_i32, %c0_i32_0 : i32, i32, i32
  }
  func.func @transform_3(%arg0: i32, %arg1: i32) -> (i32, i32, i32) {
    %c0_i32 = arith.constant 0 : i32
    %c0_i32_0 = arith.constant 0 : i32
    %c0_i32_1 = arith.constant 0 : i32
    return %arg0, %c0_i32, %c0_i32_0 : i32, i32, i32
  }
  func.func @transform_4(%arg0: i32, %arg1: i32) -> (i32, i32, i32) {
    %c0_i32 = arith.constant 0 : i32
    %c0_i32_0 = arith.constant 0 : i32
    return %arg0, %arg1, %c0_i32 : i32, i32, i32
  }
  func.func @transform_5(%arg0: i32, %arg1: i32) -> (i32, i32, i32) {
    %c0_i32 = arith.constant 0 : i32
    %c0_i32_0 = arith.constant 0 : i32
    return %arg0, %arg1, %c0_i32 : i32, i32, i32
  }
}

</mosaic_0001>

<llo_original>
// kernel: tpu_custom_call.1
$region0: #{tpu_custom_call.1}
  #allocation0 [shape = 'u32[]', space=smem, size = 0x4, offset = 0x4, fixed_abs, tag = 'smem constant byte address 0x4 - core index']
  #allocation1 [shape = 'u32[144,128]{1,0:T(1,128)}', space=vmem, size = 0x12000, scoped, tag = 'internal scratch']
  %s0 = inlined_call_operand.hbm [shape: f32[128,128], index: 0, kind: input, shape index: {}]
  %s1 = inlined_call_operand.hbm [shape: f32[1,128,128], index: 1, kind: input, shape index: {}]
  %s2 = inlined_call_operand.hbm [shape: f32[1,128,128], index: 2, kind: input, shape index: {}]
  %s3 = inlined_call_operand.vmem [shape: f32[1,1,128], index: 3, kind: input, shape index: {}]
  %s4 = inlined_call_operand.hbm [shape: bf16[1,128,128], index: 4, kind: output, shape index: {0}]
  %s5 = inlined_call_operand.hbm [shape: f32[1,128,128], index: 5, kind: output, shape index: {1}]
  %6 = xla_tuple %s4, %s5
  %s7 = sld [smem:[#allocation0]]
  $region46: #{tpu_custom_call.1} parent=0
    _
  %s9 = ssub.s32 1, %s7
  %s10 = scalar_select 0, %s9, %s7
  $region1: #{tpu_custom_call.1} parent=0
    #allocation2 [shape = 'u8[65536]{0}', space=vmem, size = 0x10000, scoped, tag = 'input window, operand 0, single buffered']
    #allocation3 [shape = 's32[1]{0}', space=sflag, size = 0x4, scoped, tag = 'scoped memory for tpu_custom_call.1']
    #allocation4 [shape = 's32[1]{0}', space=sflag, size = 0x4, scoped, tag = 'scoped memory for tpu_custom_call.1']
    #allocation5 [shape = 'u8[65536]{0}', space=vmem, size = 0x10000, scoped, tag = 'input window, operand 1, single buffered']
    #allocation6 [shape = 's32[1]{0}', space=sflag, size = 0x4, scoped, tag = 'scoped memory for tpu_custom_call.1']
    #allocation7 [shape = 'u8[65536]{0}', space=vmem, size = 0x10000, scoped, tag = 'input window, operand 2, single buffered']
    #allocation8 [shape = 'u8[32768]{0}', space=vmem, size = 0x8000, scoped, tag = 'output window, operand 0, single buffered']
    #allocation9 [shape = 'u8[65536]{0}', space=vmem, size = 0x10000, scoped, tag = 'output window, operand 1, single buffered']
    #allocation10 [shape = 's32[1]{0}', space=sflag, size = 0x4, scoped, tag = 'scoped memory for tpu_custom_call.1']
    %11 = vsyncpa [#allocation3], 0
    %12 = vsyncpa [#allocation6], 0
    %13 = vsyncpa [#allocation4], 0
    %14 = vsyncpa [#allocation10], 0
    // Predicated region
    $region2: #{tpu_custom_call.1} parent=1 // pred_check
      _
    $region3: #{tpu_custom_call.1} parent=1 // pred_check_branch
      %16 = sbr.rel (0) target = $region5
    $region4: #{tpu_custom_call.1} parent=1 // pred_region
      %s18 = ssub.s32 2048, 2048
      %19 = vsyncadd [#allocation3], %s18
      %s20 = sshll.u32 [#allocation2], 4
      %s21 = int_to_ptr.vmem [resolvable:$true] %s20
      %26 = dma.hbm_to_vmem [thread:$0]  %s0, 2048, %s21, [#allocation3], 128, 128, 8
    $region5: #{tpu_custom_call.1} parent=1 // pred_fallthru
      _
    // Predicated region
    $region6: #{tpu_custom_call.1} parent=1 // pred_check
      _
    $region7: #{tpu_custom_call.1} parent=1 // pred_check_branch
      %28 = sbr.rel (0) target = $region9
    $region8: #{tpu_custom_call.1} parent=1 // pred_region
      %s30 = ssub.s32 2048, 2048
      %31 = vsyncadd [#allocation6], %s30
      %s32 = sshll.u32 [#allocation5], 4
      %s33 = int_to_ptr.vmem [resolvable:$true] %s32
      %38 = dma.hbm_to_vmem [thread:$0]  %s1, 2048, %s33, [#allocation6], 128, 128, 8
    $region9: #{tpu_custom_call.1} parent=1 // pred_fallthru
      _
    // Predicated region
    $region10: #{tpu_custom_call.1} parent=1 // pred_check
      _
    $region11: #{tpu_custom_call.1} parent=1 // pred_check_branch
      %40 = sbr.rel (0) target = $region13
    $region12: #{tpu_custom_call.1} parent=1 // pred_region
      %s42 = ssub.s32 2048, 2048
      %43 = vsyncadd [#allocation6], %s42
      %s44 = sshll.u32 [#allocation7], 4
      %s45 = int_to_ptr.vmem [resolvable:$true] %s44
      %50 = dma.hbm_to_vmem [thread:$0]  %s2, 2048, %s45, [#allocation6], 128, 128, 8
    $region13: #{tpu_custom_call.1} parent=1 // pred_fallthru
      _
    // Predicated region
    $region14: #{tpu_custom_call.1} parent=1 // pred_check
      _
    $region15: #{tpu_custom_call.1} parent=1 // pred_check_branch
      %52 = sbr.rel (0) target = $region17
    $region16: #{tpu_custom_call.1} parent=1 // pred_region
      _
    $region17: #{tpu_custom_call.1} parent=1 // pred_fallthru
      _
    // Predicated region
    $region18: #{tpu_custom_call.1} parent=1 // pred_check
      _
    $region19: #{tpu_custom_call.1} parent=1 // pred_check_branch
      %54 = sbr.rel (0) target = $region21
    $region20: #{tpu_custom_call.1} parent=1 // pred_region
      %55 = dma.done [#allocation3], 2048
    $region21: #{tpu_custom_call.1} parent=1 // pred_fallthru
      _
    // Predicated region
    $region22: #{tpu_custom_call.1} parent=1 // pred_check
      _
    $region23: #{tpu_custom_call.1} parent=1 // pred_check_branch
      %57 = sbr.rel (0) target = $region25
    $region24: #{tpu_custom_call.1} parent=1 // pred_region
      %58 = dma.done [#allocation6], 2048
    $region25: #{tpu_custom_call.1} parent=1 // pred_fallthru
      _
    // Predicated region
    $region26: #{tpu_custom_call.1} parent=1 // pred_check
      _
    $region27: #{tpu_custom_call.1} parent=1 // pred_check_branch
      %60 = sbr.rel (0) target = $region29
    $region28: #{tpu_custom_call.1} parent=1 // pred_region
      %61 = dma.done [#allocation6], 2048
    $region29: #{tpu_custom_call.1} parent=1 // pred_fallthru
      _
    %v62 = vld [vmem:[#allocation2] sm:$0xff]
    %v63 = vld [vmem:[#allocation2 + $0x8] sm:$0xff]
    %v64 = vld [vmem:[#allocation2 + $0x10] sm:$0xff]
    %v65 = vld [vmem:[#allocation2 + $0x18] sm:$0xff]
    %v66 = vld [vmem:[#allocation2 + $0x20] sm:$0xff]
    %v67 = vld [vmem:[#allocation2 + $0x28] sm:$0xff]
    %v68 = vld [vmem:[#allocation2 + $0x30] sm:$0xff]
    %v69 = vld [vmem:[#allocation2 + $0x38] sm:$0xff]
    %v70 = vld [vmem:[#allocation2 + $0x40] sm:$0xff]
    %v71 = vld [vmem:[#allocation2 + $0x48] sm:$0xff]
    %v72 = vld [vmem:[#allocation2 + $0x50] sm:$0xff]
    %v73 = vld [vmem:[#allocation2 + $0x58] sm:$0xff]
    %v74 = vld [vmem:[#allocation2 + $0x60] sm:$0xff]
    %v75 = vld [vmem:[#allocation2 + $0x68] sm:$0xff]
    %v76 = vld [vmem:[#allocation2 + $0x70] sm:$0xff]
    %v77 = vld [vmem:[#allocation2 + $0x78] sm:$0xff]
    %v78 = vld [vmem:[#allocation5] sm:$0xff]
    %v79 = vld [vmem:[#allocation5 + $0x8] sm:$0xff]
    %v80 = vld [vmem:[#allocation5 + $0x10] sm:$0xff]
    %v81 = vld [vmem:[#allocation5 + $0x18] sm:$0xff]
    %v82 = vld [vmem:[#allocation5 + $0x20] sm:$0xff]
    %v83 = vld [vmem:[#allocation5 + $0x28] sm:$0xff]
    %v84 = vld [vmem:[#allocation5 + $0x30] sm:$0xff]
    %v85 = vld [vmem:[#allocation5 + $0x38] sm:$0xff]
    %v86 = vld [vmem:[#allocation5 + $0x40] sm:$0xff]
    %v87 = vld [vmem:[#allocation5 + $0x48] sm:$0xff]
    %v88 = vld [vmem:[#allocation5 + $0x50] sm:$0xff]
    %v89 = vld [vmem:[#allocation5 + $0x58] sm:$0xff]
    %v90 = vld [vmem:[#allocation5 + $0x60] sm:$0xff]
    %v91 = vld [vmem:[#allocation5 + $0x68] sm:$0xff]
    %v92 = vld [vmem:[#allocation5 + $0x70] sm:$0xff]
    %v93 = vld [vmem:[#allocation5 + $0x78] sm:$0xff]
    %v94 = vld [vmem:[#allocation7] sm:$0xff]
    %v95 = vld [vmem:[#allocation7 + $0x8] sm:$0xff]
    %v96 = vld [vmem:[#allocation7 + $0x10] sm:$0xff]
    %v97 = vld [vmem:[#allocation7 + $0x18] sm:$0xff]
    %v98 = vld [vmem:[#allocation7 + $0x20] sm:$0xff]
    %v99 = vld [vmem:[#allocation7 + $0x28] sm:$0xff]
    %v100 = vld [vmem:[#allocation7 + $0x30] sm:$0xff]
    %v101 = vld [vmem:[#allocation7 + $0x38] sm:$0xff]
    %v102 = vld [vmem:[#allocation7 + $0x40] sm:$0xff]
    %v103 = vld [vmem:[#allocation7 + $0x48] sm:$0xff]
    %v104 = vld [vmem:[#allocation7 + $0x50] sm:$0xff]
    %v105 = vld [vmem:[#allocation7 + $0x58] sm:$0xff]
    %v106 = vld [vmem:[#allocation7 + $0x60] sm:$0xff]
    %v107 = vld [vmem:[#allocation7 + $0x68] sm:$0xff]
    %v108 = vld [vmem:[#allocation7 + $0x70] sm:$0xff]
    %v109 = vld [vmem:[#allocation7 + $0x78] sm:$0xff]
    %110 = vmatprep.subr.mxu0 0.0
    %111 = vmatpush1.msra.mxu0 %v78
    %112 = vmatprep.subr.mxu0 0.0
    %113 = vmatpush1.msra.mxu0 %v79
    %114 = vmatprep.subr.mxu0 0.0
    %115 = vmatpush1.msra.mxu0 %v80
    %116 = vmatprep.subr.mxu0 0.0
    %117 = vmatpush1.msra.mxu0 %v81
    %118 = vmatprep.subr.mxu0 0.0
    %119 = vmatpush1.msra.mxu0 %v82
    %120 = vmatprep.subr.mxu0 0.0
    %121 = vmatpush1.msra.mxu0 %v83
    %122 = vmatprep.subr.mxu0 0.0
    %123 = vmatpush1.msra.mxu0 %v84
    %124 = vmatprep.subr.mxu0 0.0
    %125 = vmatpush1.msra.mxu0 %v85
    %126 = vmatprep.subr.mxu0 0.0
    %127 = vmatpush1.msra.mxu0 %v86
    %128 = vmatprep.subr.mxu0 0.0
    %129 = vmatpush1.msra.mxu0 %v87
    %130 = vmatprep.subr.mxu0 0.0
    %131 = vmatpush1.msra.mxu0 %v88
    %132 = vmatprep.subr.mxu0 0.0
    %133 = vmatpush1.msra.mxu0 %v89
    %134 = vmatprep.subr.mxu0 0.0
    %135 = vmatpush1.msra.mxu0 %v90
    %136 = vmatprep.subr.mxu0 0.0
    %137 = vmatpush1.msra.mxu0 %v91
    %138 = vmatprep.subr.mxu0 0.0
    %139 = vmatpush1.msra.mxu0 %v92
    %140 = vmatprep.subr.mxu0 0.0
    %141 = vmatpush1.msra.mxu0 %v93
    %142 = vmatprep.subr.mxu0 0.0
    %143 = vmatpush1.msra.mxu0 0.0
    %144 = vmatprep.subr.mxu0 0.0
    %145 = vmatpush1.msra.mxu0 0.0
    %146 = vmatprep.subr.mxu0 0.0
    %147 = vmatpush1.msra.mxu0 0.0
    %148 = vmatprep.subr.mxu0 0.0
    %149 = vmatpush1.msra.mxu0 0.0
    %150 = vmatprep.subr.mxu0 0.0
    %151 = vmatpush1.msra.mxu0 0.0
    %152 = vmatprep.subr.mxu0 0.0
    %153 = vmatpush1.msra.mxu0 0.0
    %154 = vmatprep.subr.mxu0 0.0
    %155 = vmatpush1.msra.mxu0 0.0
    %156 = vmatprep.subr.mxu0 0.0
    %157 = vmatpush1.msra.mxu0 0.0
    %158 = vmatprep.subr.mxu0 0.0
    %159 = vmatpush1.msra.mxu0 0.0
    %160 = vmatprep.subr.mxu0 0.0
    %161 = vmatpush1.msra.mxu0 0.0
    %162 = vmatprep.subr.mxu0 0.0
    %163 = vmatpush1.msra.mxu0 0.0
    %164 = vmatprep.subr.mxu0 0.0
    %165 = vmatpush1.msra.mxu0 0.0
    %166 = vmatprep.subr.mxu0 0.0
    %167 = vmatpush1.msra.mxu0 0.0
    %168 = vmatprep.subr.mxu0 0.0
    %169 = vmatpush1.msra.mxu0 0.0
    %170 = vmatprep.subr.mxu0 0.0
    %171 = vmatpush1.msra.mxu0 0.0
    %172 = vmatprep.subr.mxu0 0.0
    %173 = vmatpush1.msra.mxu0 0.0
    %174 = vmatprep.mubr.f32.mxu0 0.0
    %175 = vmatmul.mubr.f32.gmra.mrb[0].mxu0 %v62
    %v176 = vpop.f32.mrb[0].mxu0
    %v177 = vadd.f32 0.0, %v176
    %v178 = vpop.f32.mrb[0].mxu0
    %179 = vmatprep.mubr.f32.mxu0 0.0
    %180 = vmatmul.mubr.f32.gmra.mrb[0].mxu0 %v63
    %v181 = vpop.f32.mrb[0].mxu0
    %v182 = vadd.f32 0.0, %v181
    %v183 = vpop.f32.mrb[0].mxu0
    %184 = vmatprep.mubr.f32.mxu0 0.0
    %185 = vmatmul.mubr.f32.gmra.mrb[0].mxu0 %v64
    %v186 = vpop.f32.mrb[0].mxu0
    %v187 = vadd.f32 0.0, %v186
    %v188 = vpop.f32.mrb[0].mxu0
    %189 = vmatprep.mubr.f32.mxu0 0.0
    %190 = vmatmul.mubr.f32.gmra.mrb[0].mxu0 %v65
    %v191 = vpop.f32.mrb[0].mxu0
    %v192 = vadd.f32 0.0, %v191
    %v193 = vpop.f32.mrb[0].mxu0
    %194 = vmatprep.mubr.f32.mxu0 0.0
    %195 = vmatmul.mubr.f32.gmra.mrb[0].mxu0 %v66
    %v196 = vpop.f32.mrb[0].mxu0
    %v197 = vadd.f32 0.0, %v196
    %v198 = vpop.f32.mrb[0].mxu0
    %199 = vmatprep.mubr.f32.mxu0 0.0
    %200 = vmatmul.mubr.f32.gmra.mrb[0].mxu0 %v67
    %v201 = vpop.f32.mrb[0].mxu0
    %v202 = vadd.f32 0.0, %v201
    %v203 = vpop.f32.mrb[0].mxu0
    %204 = vmatprep.mubr.f32.mxu0 0.0
    %205 = vmatmul.mubr.f32.gmra.mrb[0].mxu0 %v68
    %v206 = vpop.f32.mrb[0].mxu0
    %v207 = vadd.f32 0.0, %v206
    %v208 = vpop.f32.mrb[0].mxu0
    %209 = vmatprep.mubr.f32.mxu0 0.0
    %210 = vmatmul.mubr.f32.gmra.mrb[0].mxu0 %v69
    %v211 = vpop.f32.mrb[0].mxu0
    %v212 = vadd.f32 0.0, %v211
    %v213 = vpop.f32.mrb[0].mxu0
    %214 = vmatprep.mubr.f32.mxu0 0.0
    %215 = vmatmul.mubr.f32.gmra.mrb[0].mxu0 %v70
    %v216 = vpop.f32.mrb[0].mxu0
    %v217 = vadd.f32 0.0, %v216
    %v218 = vpop.f32.mrb[0].mxu0
    %219 = vmatprep.mubr.f32.mxu0 0.0
    %220 = vmatmul.mubr.f32.gmra.mrb[0].mxu0 %v71
    %v221 = vpop.f32.mrb[0].mxu0
    %v222 = vadd.f32 0.0, %v221
    %v223 = vpop.f32.mrb[0].mxu0
    %224 = vmatprep.mubr.f32.mxu0 0.0
    %225 = vmatmul.mubr.f32.gmra.mrb[0].mxu0 %v72
    %v226 = vpop.f32.mrb[0].mxu0
    %v227 = vadd.f32 0.0, %v226
    %v228 = vpop.f32.mrb[0].mxu0
    %229 = vmatprep.mubr.f32.mxu0 0.0
    %230 = vmatmul.mubr.f32.gmra.mrb[0].mxu0 %v73
    %v231 = vpop.f32.mrb[0].mxu0
    %v232 = vadd.f32 0.0, %v231
    %v233 = vpop.f32.mrb[0].mxu0
    %234 = vmatprep.mubr.f32.mxu0 0.0
    %235 = vmatmul.mubr.f32.gmra.mrb[0].mxu0 %v74
    %v236 = vpop.f32.mrb[0].mxu0
    %v237 = vadd.f32 0.0, %v236
    %v238 = vpop.f32.mrb[0].mxu0
    %239 = vmatprep.mubr.f32.mxu0 0.0
    %240 = vmatmul.mubr.f32.gmra.mrb[0].mxu0 %v75
    %v241 = vpop.f32.mrb[0].mxu0
    %v242 = vadd.f32 0.0, %v241
    %v243 = vpop.f32.mrb[0].mxu0
    %244 = vmatprep.mubr.f32.mxu0 0.0
    %245 = vmatmul.mubr.f32.gmra.mrb[0].mxu0 %v76
    %v246 = vpop.f32.mrb[0].mxu0
    %v247 = vadd.f32 0.0, %v246
    %v248 = vpop.f32.mrb[0].mxu0
    %249 = vmatprep.mubr.f32.mxu0 0.0
    %250 = vmatmul.mubr.f32.gmra.mrb[0].mxu0 %v77
    %v251 = vpop.f32.mrb[0].mxu0
    %v252 = vadd.f32 0.0, %v251
    %v253 = vpop.f32.mrb[0].mxu0
    %254 = vdwg.mxu0
    %v255 = vld [vmem:[%s3] sm:$0x1]
    %v257 = vlaneseq
    %v258 = vshrl.u32 %v257, 7
    %v259 = vsub.s32 0, %v258
    %v260 = vrot.slane %v255, %v259
    %262 = vmatprep.subr.mxu0 0.0
    %263 = vmatpush1.msra.mxu0 %v94
    %264 = vmatprep.subr.mxu0 0.0
    %265 = vmatpush1.msra.mxu0 %v95
    %266 = vmatprep.subr.mxu0 0.0
    %267 = vmatpush1.msra.mxu0 %v96
    %268 = vmatprep.subr.mxu0 0.0
    %269 = vmatpush1.msra.mxu0 %v97
    %270 = vmatprep.subr.mxu0 0.0
    %271 = vmatpush1.msra.mxu0 %v98
    %272 = vmatprep.subr.mxu0 0.0
    %273 = vmatpush1.msra.mxu0 %v99
    %274 = vmatprep.subr.mxu0 0.0
    %275 = vmatpush1.msra.mxu0 %v100
    %276 = vmatprep.subr.mxu0 0.0
    %277 = vmatpush1.msra.mxu0 %v101
    %278 = vmatprep.subr.mxu0 0.0
    %279 = vmatpush1.msra.mxu0 %v102
    %280 = vmatprep.subr.mxu0 0.0
    %281 = vmatpush1.msra.mxu0 %v103
    %282 = vmatprep.subr.mxu0 0.0
    %283 = vmatpush1.msra.mxu0 %v104
    %284 = vmatprep.subr.mxu0 0.0
    %285 = vmatpush1.msra.mxu0 %v105
    %286 = vmatprep.subr.mxu0 0.0
    %287 = vmatpush1.msra.mxu0 %v106
    %288 = vmatprep.subr.mxu0 0.0
    %289 = vmatpush1.msra.mxu0 %v107
    %290 = vmatprep.subr.mxu0 0.0
    %291 = vmatpush1.msra.mxu0 %v108
    %292 = vmatprep.subr.mxu0 0.0
    %293 = vmatpush1.msra.mxu0 %v109
    %294 = vmatprep.subr.mxu0 0.0
    %295 = vmatpush1.msra.mxu0 0.0
    %296 = vmatprep.subr.mxu0 0.0
    %297 = vmatpush1.msra.mxu0 0.0
    %298 = vmatprep.subr.mxu0 0.0
    %299 = vmatpush1.msra.mxu0 0.0
    %300 = vmatprep.subr.mxu0 0.0
    %301 = vmatpush1.msra.mxu0 0.0
    %302 = vmatprep.subr.mxu0 0.0
    %303 = vmatpush1.msra.mxu0 0.0
    %304 = vmatprep.subr.mxu0 0.0
    %305 = vmatpush1.msra.mxu0 0.0
    %306 = vmatprep.subr.mxu0 0.0
    %307 = vmatpush1.msra.mxu0 0.0
    %308 = vmatprep.subr.mxu0 0.0
    %309 = vmatpush1.msra.mxu0 0.0
    %310 = vmatprep.subr.mxu0 0.0
    %311 = vmatpush1.msra.mxu0 0.0
    %312 = vmatprep.subr.mxu0 0.0
    %313 = vmatpush1.msra.mxu0 0.0
    %314 = vmatprep.subr.mxu0 0.0
    %315 = vmatpush1.msra.mxu0 0.0
    %316 = vmatprep.subr.mxu0 0.0
    %317 = vmatpush1.msra.mxu0 0.0
    %318 = vmatprep.subr.mxu0 0.0
    %319 = vmatpush1.msra.mxu0 0.0
    %320 = vmatprep.subr.mxu0 0.0
    %321 = vmatpush1.msra.mxu0 0.0
    %322 = vmatprep.subr.mxu0 0.0
    %323 = vmatpush1.msra.mxu0 0.0
    %324 = vmatprep.subr.mxu0 0.0
    %325 = vmatpush1.msra.mxu0 0.0
    %326 = vmatprep.mubr.f32.mxu0 0.0
    %327 = vmatmul.mubr.f32.gmra.mrb[0].mxu0 %v62
    %v328 = vpop.f32.mrb[0].mxu0
    %v329 = vadd.f32 %v260, %v328
    %v330 = vpop.f32.mrb[0].mxu0
    %331 = vmatprep.mubr.f32.mxu0 0.0
    %332 = vmatmul.mubr.f32.gmra.mrb[0].mxu0 %v63
    %v333 = vpop.f32.mrb[0].mxu0
    %v334 = vadd.f32 %v260, %v333
    %v335 = vpop.f32.mrb[0].mxu0
    %336 = vmatprep.mubr.f32.mxu0 0.0
    %337 = vmatmul.mubr.f32.gmra.mrb[0].mxu0 %v64
    %v338 = vpop.f32.mrb[0].mxu0
    %v339 = vadd.f32 %v260, %v338
    %v340 = vpop.f32.mrb[0].mxu0
    %341 = vmatprep.mubr.f32.mxu0 0.0
    %342 = vmatmul.mubr.f32.gmra.mrb[0].mxu0 %v65
    %v343 = vpop.f32.mrb[0].mxu0
    %v344 = vadd.f32 %v260, %v343
    %v345 = vpop.f32.mrb[0].mxu0
    %346 = vmatprep.mubr.f32.mxu0 0.0
    %347 = vmatmul.mubr.f32.gmra.mrb[0].mxu0 %v66
    %v348 = vpop.f32.mrb[0].mxu0
    %v349 = vadd.f32 %v260, %v348
    %v350 = vpop.f32.mrb[0].mxu0
    %351 = vmatprep.mubr.f32.mxu0 0.0
    %352 = vmatmul.mubr.f32.gmra.mrb[0].mxu0 %v67
    %v353 = vpop.f32.mrb[0].mxu0
    %v354 = vadd.f32 %v260, %v353
    %v355 = vpop.f32.mrb[0].mxu0
    %356 = vmatprep.mubr.f32.mxu0 0.0
    %357 = vmatmul.mubr.f32.gmra.mrb[0].mxu0 %v68
    %v358 = vpop.f32.mrb[0].mxu0
    %v359 = vadd.f32 %v260, %v358
    %v360 = vpop.f32.mrb[0].mxu0
    %361 = vmatprep.mubr.f32.mxu0 0.0
    %362 = vmatmul.mubr.f32.gmra.mrb[0].mxu0 %v69
    %v363 = vpop.f32.mrb[0].mxu0
    %v364 = vadd.f32 %v260, %v363
    %v365 = vpop.f32.mrb[0].mxu0
    %366 = vmatprep.mubr.f32.mxu0 0.0
    %367 = vmatmul.mubr.f32.gmra.mrb[0].mxu0 %v70
    %v368 = vpop.f32.mrb[0].mxu0
    %v369 = vadd.f32 %v260, %v368
    %v370 = vpop.f32.mrb[0].mxu0
    %371 = vmatprep.mubr.f32.mxu0 0.0
    %372 = vmatmul.mubr.f32.gmra.mrb[0].mxu0 %v71
    %v373 = vpop.f32.mrb[0].mxu0
    %v374 = vadd.f32 %v260, %v373
    %v375 = vpop.f32.mrb[0].mxu0
    %376 = vmatprep.mubr.f32.mxu0 0.0
    %377 = vmatmul.mubr.f32.gmra.mrb[0].mxu0 %v72
    %v378 = vpop.f32.mrb[0].mxu0
    %v379 = vadd.f32 %v260, %v378
    %v380 = vpop.f32.mrb[0].mxu0
    %381 = vmatprep.mubr.f32.mxu0 0.0
    %382 = vmatmul.mubr.f32.gmra.mrb[0].mxu0 %v73
    %v383 = vpop.f32.mrb[0].mxu0
    %v384 = vadd.f32 %v260, %v383
    %v385 = vpop.f32.mrb[0].mxu0
    %386 = vmatprep.mubr.f32.mxu0 0.0
    %387 = vmatmul.mubr.f32.gmra.mrb[0].mxu0 %v74
    %v388 = vpop.f32.mrb[0].mxu0
    %v389 = vadd.f32 %v260, %v388
    %v390 = vpop.f32.mrb[0].mxu0
    %391 = vmatprep.mubr.f32.mxu0 0.0
    %392 = vmatmul.mubr.f32.gmra.mrb[0].mxu0 %v75
    %v393 = vpop.f32.mrb[0].mxu0
    %v394 = vadd.f32 %v260, %v393
    %v395 = vpop.f32.mrb[0].mxu0
    %396 = vmatprep.mubr.f32.mxu0 0.0
    %397 = vmatmul.mubr.f32.gmra.mrb[0].mxu0 %v76
    %v398 = vpop.f32.mrb[0].mxu0
    %v399 = vadd.f32 %v260, %v398
    %v400 = vpop.f32.mrb[0].mxu0
    %401 = vmatprep.mubr.f32.mxu0 0.0
    %402 = vmatmul.mubr.f32.gmra.mrb[0].mxu0 %v77
    %v403 = vpop.f32.mrb[0].mxu0
    %v404 = vadd.f32 %v260, %v403
    %v405 = vpop.f32.mrb[0].mxu0
    %406 = vdwg.mxu0
    %v407 = vpack.c.bf16 %v182, %v177
    %v408 = vpack.c.bf16 %v192, %v187
    %v409 = vpack.c.bf16 %v202, %v197
    %v410 = vpack.c.bf16 %v212, %v207
    %v411 = vpack.c.bf16 %v222, %v217
    %v412 = vpack.c.bf16 %v232, %v227
    %v413 = vpack.c.bf16 %v242, %v237
    %v414 = vpack.c.bf16 %v252, %v247
    %v423 = vunpack.c.l.b16 %v407
    %v424 = vunpack.c.h.b16 %v407
    %v425 = vunpack.c.l.b16 %v408
    %v426 = vunpack.c.h.b16 %v408
    %v427 = vunpack.c.l.b16 %v409
    %v428 = vunpack.c.h.b16 %v409
    %v429 = vunpack.c.l.b16 %v410
    %v430 = vunpack.c.h.b16 %v410
    %v431 = vunpack.c.l.b16 %v411
    %v432 = vunpack.c.h.b16 %v411
    %v433 = vunpack.c.l.b16 %v412
    %v434 = vunpack.c.h.b16 %v412
    %v435 = vunpack.c.l.b16 %v413
    %v436 = vunpack.c.h.b16 %v413
    %v437 = vunpack.c.l.b16 %v414
    %v438 = vunpack.c.h.b16 %v414
    %v439 = vpack.c.b16 %v423, %v423
    %v440 = vpack.c.b16 %v424, %v424
    %v441 = vpack.c.b16 %v425, %v425
    %v442 = vpack.c.b16 %v426, %v426
    %v443 = vpack.c.b16 %v427, %v427
    %v444 = vpack.c.b16 %v428, %v428
    %v445 = vpack.c.b16 %v429, %v429
    %v446 = vpack.c.b16 %v430, %v430
    %v447 = vpack.c.b16 %v431, %v431
    %v448 = vpack.c.b16 %v432, %v432
    %v449 = vpack.c.b16 %v433, %v433
    %v450 = vpack.c.b16 %v434, %v434
    %v451 = vpack.c.b16 %v435, %v435
    %v452 = vpack.c.b16 %v436, %v436
    %v453 = vpack.c.b16 %v437, %v437
    %v454 = vpack.c.b16 %v438, %v438
    %471 = vst [vmem:[#allocation8] sm:$0xf] %v439
    %472 = vst [vmem:[#allocation8 + $0x4] sm:$0xf] %v440
    %473 = vst [vmem:[#allocation8 + $0x8] sm:$0xf] %v441
    %474 = vst [vmem:[#allocation8 + $0xc] sm:$0xf] %v442
    %475 = vst [vmem:[#allocation8 + $0x10] sm:$0xf] %v443
    %476 = vst [vmem:[#allocation8 + $0x14] sm:$0xf] %v444
    %477 = vst [vmem:[#allocation8 + $0x18] sm:$0xf] %v445
    %478 = vst [vmem:[#allocation8 + $0x1c] sm:$0xf] %v446
    %479 = vst [vmem:[#allocation8 + $0x20] sm:$0xf] %v447
    %480 = vst [vmem:[#allocation8 + $0x24] sm:$0xf] %v448
    %481 = vst [vmem:[#allocation8 + $0x28] sm:$0xf] %v449
    %482 = vst [vmem:[#allocation8 + $0x2c] sm:$0xf] %v450
    %483 = vst [vmem:[#allocation8 + $0x30] sm:$0xf] %v451
    %484 = vst [vmem:[#allocation8 + $0x34] sm:$0xf] %v452
    %485 = vst [vmem:[#allocation8 + $0x38] sm:$0xf] %v453
    %486 = vst [vmem:[#allocation8 + $0x3c] sm:$0xf] %v454
    %487 = vst [vmem:[#allocation9] sm:$0xff] %v329
    %488 = vst [vmem:[#allocation9 + $0x8] sm:$0xff] %v334
    %489 = vst [vmem:[#allocation9 + $0x10] sm:$0xff] %v339
    %490 = vst [vmem:[#allocation9 + $0x18] sm:$0xff] %v344
    %491 = vst [vmem:[#allocation9 + $0x20] sm:$0xff] %v349
    %492 = vst [vmem:[#allocation9 + $0x28] sm:$0xff] %v354
    %493 = vst [vmem:[#allocation9 + $0x30] sm:$0xff] %v359
    %494 = vst [vmem:[#allocation9 + $0x38] sm:$0xff] %v364
    %495 = vst [vmem:[#allocation9 + $0x40] sm:$0xff] %v369
    %496 = vst [vmem:[#allocation9 + $0x48] sm:$0xff] %v374
    %497 = vst [vmem:[#allocation9 + $0x50] sm:$0xff] %v379
    %498 = vst [vmem:[#allocation9 + $0x58] sm:$0xff] %v384
    %499 = vst [vmem:[#allocation9 + $0x60] sm:$0xff] %v389
    %500 = vst [vmem:[#allocation9 + $0x68] sm:$0xff] %v394
    %501 = vst [vmem:[#allocation9 + $0x70] sm:$0xff] %v399
    %502 = vst [vmem:[#allocation9 + $0x78] sm:$0xff] %v404
    // Predicated region
    $region30: #{tpu_custom_call.1} parent=1 // pred_check
      _
    $region31: #{tpu_custom_call.1} parent=1 // pred_check_branch
      %504 = sbr.rel (0) target = $region33
    $region32: #{tpu_custom_call.1} parent=1 // pred_region
      %s506 = ssub.s32 1024, 1024
      %507 = vsyncadd [#allocation4], %s506
      %s508 = sshll.u32 [#allocation8], 4
      %s509 = int_to_ptr.vmem [resolvable:$true] %s508
      %514 = dma.vmem_to_hbm [thread:$0]  %s509, 1024, %s4, [#allocation4], 64, 64, 4
    $region33: #{tpu_custom_call.1} parent=1 // pred_fallthru
      _
    // Predicated region
    $region34: #{tpu_custom_call.1} parent=1 // pred_check
      _
    $region35: #{tpu_custom_call.1} parent=1 // pred_check_branch
      %516 = sbr.rel (0) target = $region37
    $region36: #{tpu_custom_call.1} parent=1 // pred_region
      %s518 = ssub.s32 2048, 2048
      %519 = vsyncadd [#allocation10], %s518
      %s520 = sshll.u32 [#allocation9], 4
      %s521 = int_to_ptr.vmem [resolvable:$true] %s520
      %526 = dma.vmem_to_hbm [thread:$0]  %s521, 2048, %s5, [#allocation10], 128, 128, 8
    $region37: #{tpu_custom_call.1} parent=1 // pred_fallthru
      _
    // Predicated region
    $region38: #{tpu_custom_call.1} parent=1 // pred_check
      _
    $region39: #{tpu_custom_call.1} parent=1 // pred_check_branch
      %528 = sbr.rel (0) target = $region41
    $region40: #{tpu_custom_call.1} parent=1 // pred_region
      %529 = dma.done [#allocation4], 1024
    $region41: #{tpu_custom_call.1} parent=1 // pred_fallthru
      _
    // Predicated region
    $region42: #{tpu_custom_call.1} parent=1 // pred_check
      _
    $region43: #{tpu_custom_call.1} parent=1 // pred_check_branch
      %531 = sbr.rel (0) target = $region45
    $region44: #{tpu_custom_call.1} parent=1 // pred_region
      %532 = dma.done [#allocation10], 2048
    $region45: #{tpu_custom_call.1} parent=1 // pred_fallthru
      _
    %533 = vsyncpa [#allocation3], 1
    %534 = vsyncpa [#allocation6], 1
    %535 = vsyncpa [#allocation4], 1
    %536 = vsyncpa [#allocation10], 1

</llo_original>
